<compile_context>
chip_gen: v6e
topology: v6e:2x2x1
jax: 0.10.0
libtpu: 0.0.40
codegen_flags: <defaults>
</compile_context>

<pallas_src>
import jax
import jax.numpy as jnp
from jax.experimental import pallas as pl
from jax.experimental.pallas import tpu as pltpu

# Module hyper-parameters (module-level globals in the original file).
LATENT_DIM = 32     # latent_dim
PARAM_DIM = 16      # param_Dim
HIDDEN = 128        # p_hidden_dim[1..3]

TB = 256            # max batch tile: fills the MXU M dim on v5e/v6e/v7x
OUT_PAD = 128       # lane-dense padded output width (PARAM_DIM=16 -> pad to 128)


def _mlp_kernel(z_ref, w1_ref, w2_ref, w3_ref, w4_ref, w5_ref, o_ref):
    """One batch tile: 4x (Linear -> ReLU), then Linear -> Sigmoid.

    Weights are bf16 (halved DMA/VMEM), dots accumulate in f32 on the MXU,
    activation math (ReLU / sigmoid) stays in f32 (v5e VPU has no bf16 VALU).
    The final store is lane-dense (128 wide); wrapper slices to PARAM_DIM.
    """
    x = z_ref[...].astype(jnp.bfloat16)
    # e_fc1 + ReLU  (latent_dim -> latent_dim)
    x = jnp.maximum(
        jnp.dot(x, w1_ref[...], preferred_element_type=jnp.float32), 0.0)
    # e_fc2 + ReLU  (latent_dim -> 128)
    x = jnp.maximum(
        jnp.dot(x.astype(jnp.bfloat16), w2_ref[...],
                preferred_element_type=jnp.float32), 0.0)
    # e_fc3 + ReLU  (128 -> 128)
    x = jnp.maximum(
        jnp.dot(x.astype(jnp.bfloat16), w3_ref[...],
                preferred_element_type=jnp.float32), 0.0)
    # e_fc4 + ReLU  (128 -> 128)
    x = jnp.maximum(
        jnp.dot(x.astype(jnp.bfloat16), w4_ref[...],
                preferred_element_type=jnp.float32), 0.0)
    # de_out + Sigmoid (128 -> 128 padded; real columns are [:PARAM_DIM])
    logits = jnp.dot(x.astype(jnp.bfloat16), w5_ref[...],
                     preferred_element_type=jnp.float32)
    # sigmoid via EUP exp + EUP approximate reciprocal (keeps the VALU slot free)
    o_ref[...] = pl.reciprocal(1.0 + jnp.exp(-logits),
                               approx=True).astype(o_ref.dtype)


def pmodel_forward(z, weights, *, tb=None):
    """z: [B, LATENT_DIM] f32. weights: 5 bf16 arrays [in, out] (already W.T)."""
    b, latent = z.shape
    w1, w2, w3, w4, w5 = weights
    out_dim = w5.shape[1]

    # Pick the batch tile: use the full (8-padded) batch when it fits in one
    # tile (avoids computing on hundreds of padded rows for tiny batches),
    # otherwise stream TB-row tiles through a 1-D grid.
    if tb is None:
        b_up8 = ((b + 7) // 8) * 8
        tb = b_up8 if b_up8 <= TB else TB

    # Lane-dense output: pad the last weight's output columns to 128 so the
    # epilogue store is an unmasked vst; slice the real columns off outside.
    w5p = jnp.zeros((w5.shape[0], OUT_PAD), w5.dtype).at[:, :out_dim].set(w5)

    # Pad batch to a multiple of the tile (padded rows are discarded after).
    b_pad = pl.cdiv(b, tb) * tb
    if b_pad != b:
        z = jnp.pad(z, ((0, b_pad - b), (0, 0)))

    const_map = lambda i: (0, 0)   # weights: same block every step -> resident
    out = pl.pallas_call(
        _mlp_kernel,
        out_shape=jax.ShapeDtypeStruct((b_pad, OUT_PAD), jnp.float32),
        grid=(b_pad // tb,),
        in_specs=[
            pl.BlockSpec((tb, latent), lambda i: (i, 0)),   # streamed z tiles
            pl.BlockSpec(w1.shape, const_map),
            pl.BlockSpec(w2.shape, const_map),
            pl.BlockSpec(w3.shape, const_map),
            pl.BlockSpec(w4.shape, const_map),
            pl.BlockSpec(w5p.shape, const_map),
        ],
        out_specs=pl.BlockSpec((tb, OUT_PAD), lambda i: (i, 0)),
        compiler_params=pltpu.CompilerParams(
            dimension_semantics=("parallel",),   # shards batch tiles on v7x's 2 TCs
            vmem_limit_bytes=64 << 20),
    )(z, w1, w2, w3, w4, w5p)
    return out[:b, :out_dim]


def init_weights():
    """Deterministic init mimicking nn.Linear(bias=False).

    PyTorch stores weight as [out, in] and computes x @ W.T; we store the
    transposed weight [in, out] directly, cast to bf16 for the MXU.
    """
    key = jax.random.PRNGKey(0)
    dims = [(LATENT_DIM, LATENT_DIM),   # e_fc1
            (LATENT_DIM, HIDDEN),       # e_fc2
            (HIDDEN, HIDDEN),           # e_fc3
            (HIDDEN, HIDDEN),           # e_fc4
            (HIDDEN, PARAM_DIM)]        # de_out
    ws = []
    for i, (fan_in, fan_out) in enumerate(dims):
        k = jax.random.fold_in(key, i)
        bound = 1.0 / (fan_in ** 0.5)   # PyTorch Linear default uniform bound
        w = jax.random.uniform(k, (fan_in, fan_out), jnp.float32,
                               minval=-bound, maxval=bound)
        ws.append(w.astype(jnp.bfloat16))
    return tuple(ws)


def _reference(z, weights):
    """Pure-JAX reference with the same numerics (bf16 inputs, f32 accumulate)."""
    x = z
    for w in weights[:-1]:
        x = jnp.maximum(jnp.dot(x.astype(jnp.bfloat16), w,
                                preferred_element_type=jnp.float32), 0.0)
    logits = jnp.dot(x.astype(jnp.bfloat16), weights[-1],
                     preferred_element_type=jnp.float32)
    return jax.nn.sigmoid(logits)


if __name__ == "__main__":
    key = jax.random.PRNGKey(0)
    weights = init_weights()

    # Small batch (single tile) and a multi-tile, non-divisible batch to
    # exercise the grid + padding path.
    for batch in (8, 300):
        z = jax.random.normal(jax.random.fold_in(key, 100 + batch),
                              (batch, LATENT_DIM), jnp.float32)
        out = pmodel_forward(z, weights)
        out = jax.block_until_ready(out)
        ref = _reference(z, weights)
        assert out.shape == (batch, PARAM_DIM)
        assert jnp.allclose(out, ref, atol=5e-3, rtol=5e-3), (
            float(jnp.max(jnp.abs(out - ref))))
    print("KERNEL_OK")
</pallas_src>

<mosaic_0001>
module attributes {stable_mosaic.version = 11 : i64} {
  func.func @_mlp_kernel(%arg0: i32, %arg1: memref<8x32xf32, #tpu.memory_space<vmem>>, %arg2: memref<32x32xbf16, #tpu.memory_space<vmem>>, %arg3: memref<32x128xbf16, #tpu.memory_space<vmem>>, %arg4: memref<128x128xbf16, #tpu.memory_space<vmem>>, %arg5: memref<128x128xbf16, #tpu.memory_space<vmem>>, %arg6: memref<128x128xbf16, #tpu.memory_space<vmem>>, %arg7: memref<8x128xf32, #tpu.memory_space<vmem>>) attributes {dimension_semantics = [#tpu.dimension_semantics<parallel>], iteration_bounds = array<i64: 1>, scalar_prefetch = 0 : i64, scratch_operands = 0 : i64, tpu.core_type = #tpu.core_type<tc>, window_params = [{transform_indices = @transform_0, window_bounds = array<i64: 8, 32>}, {pipeline_mode = #tpu.pipeline_mode<synchronous>, transform_indices = @transform_1, window_bounds = array<i64: 32, 32>}, {pipeline_mode = #tpu.pipeline_mode<synchronous>, transform_indices = @transform_2, window_bounds = array<i64: 32, 128>}, {pipeline_mode = #tpu.pipeline_mode<synchronous>, transform_indices = @transform_3, window_bounds = array<i64: 128, 128>}, {pipeline_mode = #tpu.pipeline_mode<synchronous>, transform_indices = @transform_4, window_bounds = array<i64: 128, 128>}, {pipeline_mode = #tpu.pipeline_mode<synchronous>, transform_indices = @transform_5, window_bounds = array<i64: 128, 128>}, {transform_indices = @transform_6, window_bounds = array<i64: 8, 128>}]} {
    %c0 = arith.constant 0 : index
    %c0_0 = arith.constant 0 : index
    %0 = vector.load %arg1[%c0, %c0_0] : memref<8x32xf32, #tpu.memory_space<vmem>>, vector<8x32xf32>
    %1 = arith.truncf %0 : vector<8x32xf32> to vector<8x32xbf16>
    %c0_1 = arith.constant 0 : index
    %c0_2 = arith.constant 0 : index
    %2 = vector.load %arg2[%c0_1, %c0_2] : memref<32x32xbf16, #tpu.memory_space<vmem>>, vector<32x32xbf16>
    %cst = arith.constant dense<0.000000e+00> : vector<8x32xf32>
    %3 = tpu.matmul %1, %2, %cst {dimension_numbers = #tpu.dot_dimension_numbers<[1], [0], [0], [1], [0, 0, 1, 1], [], []>} : vector<8x32xbf16>, vector<32x32xbf16>, vector<8x32xf32> -> vector<8x32xf32>
    %cst_3 = arith.constant 0.000000e+00 : f32
    %4 = vector.broadcast %cst_3 : f32 to vector<8x32xf32>
    %5 = arith.maximumf %3, %4 : vector<8x32xf32>
    %6 = arith.truncf %5 : vector<8x32xf32> to vector<8x32xbf16>
    %c0_4 = arith.constant 0 : index
    %c0_5 = arith.constant 0 : index
    %7 = vector.load %arg3[%c0_4, %c0_5] : memref<32x128xbf16, #tpu.memory_space<vmem>>, vector<32x128xbf16>
    %cst_6 = arith.constant dense<0.000000e+00> : vector<8x128xf32>
    %8 = tpu.matmul %6, %7, %cst_6 {dimension_numbers = #tpu.dot_dimension_numbers<[1], [0], [0], [1], [0, 0, 1, 1], [], []>} : vector<8x32xbf16>, vector<32x128xbf16>, vector<8x128xf32> -> vector<8x128xf32>
    %cst_7 = arith.constant 0.000000e+00 : f32
    %9 = vector.broadcast %cst_7 : f32 to vector<8x128xf32>
    %10 = arith.maximumf %8, %9 : vector<8x128xf32>
    %11 = arith.truncf %10 : vector<8x128xf32> to vector<8x128xbf16>
    %c0_8 = arith.constant 0 : index
    %c0_9 = arith.constant 0 : index
    %12 = vector.load %arg4[%c0_8, %c0_9] : memref<128x128xbf16, #tpu.memory_space<vmem>>, vector<128x128xbf16>
    %cst_10 = arith.constant dense<0.000000e+00> : vector<8x128xf32>
    %13 = tpu.matmul %11, %12, %cst_10 {dimension_numbers = #tpu.dot_dimension_numbers<[1], [0], [0], [1], [0, 0, 1, 1], [], []>} : vector<8x128xbf16>, vector<128x128xbf16>, vector<8x128xf32> -> vector<8x128xf32>
    %cst_11 = arith.constant 0.000000e+00 : f32
    %14 = vector.broadcast %cst_11 : f32 to vector<8x128xf32>
    %15 = arith.maximumf %13, %14 : vector<8x128xf32>
    %16 = arith.truncf %15 : vector<8x128xf32> to vector<8x128xbf16>
    %c0_12 = arith.constant 0 : index
    %c0_13 = arith.constant 0 : index
    %17 = vector.load %arg5[%c0_12, %c0_13] : memref<128x128xbf16, #tpu.memory_space<vmem>>, vector<128x128xbf16>
    %cst_14 = arith.constant dense<0.000000e+00> : vector<8x128xf32>
    %18 = tpu.matmul %16, %17, %cst_14 {dimension_numbers = #tpu.dot_dimension_numbers<[1], [0], [0], [1], [0, 0, 1, 1], [], []>} : vector<8x128xbf16>, vector<128x128xbf16>, vector<8x128xf32> -> vector<8x128xf32>
    %cst_15 = arith.constant 0.000000e+00 : f32
    %19 = vector.broadcast %cst_15 : f32 to vector<8x128xf32>
    %20 = arith.maximumf %18, %19 : vector<8x128xf32>
    %21 = arith.truncf %20 : vector<8x128xf32> to vector<8x128xbf16>
    %c0_16 = arith.constant 0 : index
    %c0_17 = arith.constant 0 : index
    %22 = vector.load %arg6[%c0_16, %c0_17] : memref<128x128xbf16, #tpu.memory_space<vmem>>, vector<128x128xbf16>
    %cst_18 = arith.constant dense<0.000000e+00> : vector<8x128xf32>
    %23 = tpu.matmul %21, %22, %cst_18 {dimension_numbers = #tpu.dot_dimension_numbers<[1], [0], [0], [1], [0, 0, 1, 1], [], []>} : vector<8x128xbf16>, vector<128x128xbf16>, vector<8x128xf32> -> vector<8x128xf32>
    %cst_19 = arith.constant 0.000000e+00 : f32
    %24 = vector.broadcast %cst_19 : f32 to vector<8x128xf32>
    %25 = arith.subf %24, %23 : vector<8x128xf32>
    %26 = math.exp %25 : vector<8x128xf32>
    %cst_20 = arith.constant 1.000000e+00 : f32
    %27 = vector.broadcast %cst_20 : f32 to vector<8x128xf32>
    %28 = arith.addf %27, %26 : vector<8x128xf32>
    %29 = tpu.reciprocal %28 {approx = true} : vector<8x128xf32> -> vector<8x128xf32>
    %c0_21 = arith.constant 0 : index
    %c0_22 = arith.constant 0 : index
    %30 = vector.load %arg7[%c0_21, %c0_22] : memref<8x128xf32, #tpu.memory_space<vmem>>, vector<8x128xf32>
    tpu.vector_store %arg7[%c0_21, %c0_22], %29 {strides = array<i32>} : memref<8x128xf32, #tpu.memory_space<vmem>>, vector<8x128xf32>,
    return
  }
  func.func @transform_0(%arg0: i32) -> (i32, i32) {
    %c0_i32 = arith.constant 0 : i32
    %c0_i32_0 = arith.constant 0 : i32
    return %arg0, %c0_i32 : i32, i32
  }
  func.func @transform_1(%arg0: i32) -> (i32, i32) {
    %c0_i32 = arith.constant 0 : i32
    %c0_i32_0 = arith.constant 0 : i32
    %c0_i32_1 = arith.constant 0 : i32
    return %c0_i32, %c0_i32_0 : i32, i32
  }
  func.func @transform_2(%arg0: i32) -> (i32, i32) {
    %c0_i32 = arith.constant 0 : i32
    %c0_i32_0 = arith.constant 0 : i32
    %c0_i32_1 = arith.constant 0 : i32
    return %c0_i32, %c0_i32_0 : i32, i32
  }
  func.func @transform_3(%arg0: i32) -> (i32, i32) {
    %c0_i32 = arith.constant 0 : i32
    %c0_i32_0 = arith.constant 0 : i32
    %c0_i32_1 = arith.constant 0 : i32
    return %c0_i32, %c0_i32_0 : i32, i32
  }
  func.func @transform_4(%arg0: i32) -> (i32, i32) {
    %c0_i32 = arith.constant 0 : i32
    %c0_i32_0 = arith.constant 0 : i32
    %c0_i32_1 = arith.constant 0 : i32
    return %c0_i32, %c0_i32_0 : i32, i32
  }
  func.func @transform_5(%arg0: i32) -> (i32, i32) {
    %c0_i32 = arith.constant 0 : i32
    %c0_i32_0 = arith.constant 0 : i32
    %c0_i32_1 = arith.constant 0 : i32
    return %c0_i32, %c0_i32_0 : i32, i32
  }
  func.func @transform_6(%arg0: i32) -> (i32, i32) {
    %c0_i32 = arith.constant 0 : i32
    %c0_i32_0 = arith.constant 0 : i32
    return %arg0, %c0_i32 : i32, i32
  }
}

</mosaic_0001>

<llo_original>
// kernel: tpu_custom_call.1
$region0: #{tpu_custom_call.1}
  #allocation0 [shape = 'u32[]', space=smem, size = 0x4, offset = 0x4, fixed_abs, tag = 'smem constant byte address 0x4 - core index']
  #allocation1 [shape = 'u32[144,128]{1,0:T(1,128)}', space=vmem, size = 0x12000, scoped, tag = 'internal scratch']
  %s0 = inlined_call_operand.hbm [shape: f32[8,32], index: 0, kind: input, shape index: {}]
  %s1 = inlined_call_operand.hbm [shape: bf16[32,32], index: 1, kind: input, shape index: {}]
  %s2 = inlined_call_operand.hbm [shape: bf16[32,128], index: 2, kind: input, shape index: {}]
  %s3 = inlined_call_operand.hbm [shape: bf16[128,128], index: 3, kind: input, shape index: {}]
  %s4 = inlined_call_operand.hbm [shape: bf16[128,128], index: 4, kind: input, shape index: {}]
  %s5 = inlined_call_operand.hbm [shape: bf16[128,128], index: 5, kind: input, shape index: {}]
  %s6 = inlined_call_operand.hbm [shape: f32[8,128], index: 6, kind: output, shape index: {}]
  %s7 = sld [smem:[#allocation0]]
  $region58: #{tpu_custom_call.1} parent=0
    _
  %s9 = ssub.s32 1, %s7
  %s10 = scalar_select 0, %s9, %s7
  $region1: #{tpu_custom_call.1} parent=0
    #allocation2 [shape = 'u8[4096]{0}', space=vmem, size = 0x1000, scoped, tag = 'input window, operand 0, single buffered']
    #allocation3 [shape = 's32[1]{0}', space=sflag, size = 0x4, scoped, tag = 'scoped memory for tpu_custom_call.1']
    #allocation4 [shape = 's32[1]{0}', space=sflag, size = 0x4, scoped, tag = 'scoped memory for tpu_custom_call.1']
    #allocation5 [shape = 'u8[8192]{0}', space=vmem, size = 0x2000, scoped, tag = 'input window, operand 1, single buffered']
    #allocation6 [shape = 's32[1]{0}', space=sflag, size = 0x4, scoped, tag = 'scoped memory for tpu_custom_call.1']
    #allocation7 [shape = 'u8[8192]{0}', space=vmem, size = 0x2000, scoped, tag = 'input window, operand 2, single buffered']
    #allocation8 [shape = 'u8[32768]{0}', space=vmem, size = 0x8000, scoped, tag = 'input window, operand 3, single buffered']
    #allocation9 [shape = 's32[1]{0}', space=sflag, size = 0x4, scoped, tag = 'scoped memory for tpu_custom_call.1']
    #allocation10 [shape = 'u8[32768]{0}', space=vmem, size = 0x8000, scoped, tag = 'input window, operand 4, single buffered']
    #allocation11 [shape = 'u8[32768]{0}', space=vmem, size = 0x8000, scoped, tag = 'input window, operand 5, single buffered']
    #allocation12 [shape = 's32[1]{0}', space=sflag, size = 0x4, scoped, tag = 'scoped memory for tpu_custom_call.1']
    #allocation13 [shape = 'u8[4096]{0}', space=vmem, size = 0x1000, scoped, tag = 'output window, operand 0, single buffered']
    %11 = vsyncpa [#allocation3], 0
    %12 = vsyncpa [#allocation6], 0
    %13 = vsyncpa [#allocation9], 0
    %14 = vsyncpa [#allocation12], 0
    %15 = vsyncpa [#allocation4], 0
    // Predicated region
    $region2: #{tpu_custom_call.1} parent=1 // pred_check
      _
    $region3: #{tpu_custom_call.1} parent=1 // pred_check_branch
      %17 = sbr.rel (0) target = $region5
    $region4: #{tpu_custom_call.1} parent=1 // pred_region
      %s19 = ssub.s32 128, 128
      %20 = vsyncadd [#allocation3], %s19
      %s22 = sshll.u32 [#allocation2], 4
      %s23 = int_to_ptr.vmem [resolvable:$true] %s22
      %25 = dma.hbm_to_vmem [thread:$0]  %s0, 128, %s23, [#allocation3]
    $region5: #{tpu_custom_call.1} parent=1 // pred_fallthru
      _
    // Predicated region
    $region6: #{tpu_custom_call.1} parent=1 // pred_check
      _
    $region7: #{tpu_custom_call.1} parent=1 // pred_check_branch
      %27 = sbr.rel (0) target = $region9
    $region8: #{tpu_custom_call.1} parent=1 // pred_region
      %s29 = ssub.s32 256, 256
      %30 = vsyncadd [#allocation6], %s29
      %s31 = sshll.u32 [#allocation5], 4
      %s32 = int_to_ptr.vmem [resolvable:$true] %s31
      %37 = dma.hbm_to_vmem [thread:$0]  %s1, 256, %s32, [#allocation6], 64, 64, 4
    $region9: #{tpu_custom_call.1} parent=1 // pred_fallthru
      _
    // Predicated region
    $region10: #{tpu_custom_call.1} parent=1 // pred_check
      _
    $region11: #{tpu_custom_call.1} parent=1 // pred_check_branch
      %39 = sbr.rel (0) target = $region13
    $region12: #{tpu_custom_call.1} parent=1 // pred_region
      %s41 = ssub.s32 256, 256
      %42 = vsyncadd [#allocation6], %s41
      %s43 = sshll.u32 [#allocation7], 4
      %s44 = int_to_ptr.vmem [resolvable:$true] %s43
      %49 = dma.hbm_to_vmem [thread:$0]  %s2, 256, %s44, [#allocation6], 64, 64, 4
    $region13: #{tpu_custom_call.1} parent=1 // pred_fallthru
      _
    // Predicated region
    $region14: #{tpu_custom_call.1} parent=1 // pred_check
      _
    $region15: #{tpu_custom_call.1} parent=1 // pred_check_branch
      %51 = sbr.rel (0) target = $region17
    $region16: #{tpu_custom_call.1} parent=1 // pred_region
      %s53 = ssub.s32 1024, 1024
      %54 = vsyncadd [#allocation9], %s53
      %s55 = sshll.u32 [#allocation8], 4
      %s56 = int_to_ptr.vmem [resolvable:$true] %s55
      %61 = dma.hbm_to_vmem [thread:$0]  %s3, 1024, %s56, [#allocation9], 64, 64, 4
    $region17: #{tpu_custom_call.1} parent=1 // pred_fallthru
      _
    // Predicated region
    $region18: #{tpu_custom_call.1} parent=1 // pred_check
      _
    $region19: #{tpu_custom_call.1} parent=1 // pred_check_branch
      %63 = sbr.rel (0) target = $region21
    $region20: #{tpu_custom_call.1} parent=1 // pred_region
      %s65 = ssub.s32 1024, 1024
      %66 = vsyncadd [#allocation9], %s65
      %s67 = sshll.u32 [#allocation10], 4
      %s68 = int_to_ptr.vmem [resolvable:$true] %s67
      %73 = dma.hbm_to_vmem [thread:$0]  %s4, 1024, %s68, [#allocation9], 64, 64, 4
    $region21: #{tpu_custom_call.1} parent=1 // pred_fallthru
      _
    // Predicated region
    $region22: #{tpu_custom_call.1} parent=1 // pred_check
      _
    $region23: #{tpu_custom_call.1} parent=1 // pred_check_branch
      %75 = sbr.rel (0) target = $region25
    $region24: #{tpu_custom_call.1} parent=1 // pred_region
      %s77 = ssub.s32 1024, 1024
      %78 = vsyncadd [#allocation12], %s77
      %s79 = sshll.u32 [#allocation11], 4
      %s80 = int_to_ptr.vmem [resolvable:$true] %s79
      %85 = dma.hbm_to_vmem [thread:$0]  %s5, 1024, %s80, [#allocation12], 64, 64, 4
    $region25: #{tpu_custom_call.1} parent=1 // pred_fallthru
      _
    // Predicated region
    $region26: #{tpu_custom_call.1} parent=1 // pred_check
      _
    $region27: #{tpu_custom_call.1} parent=1 // pred_check_branch
      %87 = sbr.rel (0) target = $region29
    $region28: #{tpu_custom_call.1} parent=1 // pred_region
      %88 = dma.done [#allocation3], 128
    $region29: #{tpu_custom_call.1} parent=1 // pred_fallthru
      _
    // Predicated region
    $region30: #{tpu_custom_call.1} parent=1 // pred_check
      _
    $region31: #{tpu_custom_call.1} parent=1 // pred_check_branch
      %90 = sbr.rel (0) target = $region33
    $region32: #{tpu_custom_call.1} parent=1 // pred_region
      %91 = dma.done [#allocation6], 256
    $region33: #{tpu_custom_call.1} parent=1 // pred_fallthru
      _
    // Predicated region
    $region34: #{tpu_custom_call.1} parent=1 // pred_check
      _
    $region35: #{tpu_custom_call.1} parent=1 // pred_check_branch
      %93 = sbr.rel (0) target = $region37
    $region36: #{tpu_custom_call.1} parent=1 // pred_region
      %94 = dma.done [#allocation6], 256
    $region37: #{tpu_custom_call.1} parent=1 // pred_fallthru
      _
    // Predicated region
    $region38: #{tpu_custom_call.1} parent=1 // pred_check
      _
    $region39: #{tpu_custom_call.1} parent=1 // pred_check_branch
      %96 = sbr.rel (0) target = $region41
    $region40: #{tpu_custom_call.1} parent=1 // pred_region
      %97 = dma.done [#allocation9], 1024
    $region41: #{tpu_custom_call.1} parent=1 // pred_fallthru
      _
    // Predicated region
    $region42: #{tpu_custom_call.1} parent=1 // pred_check
      _
    $region43: #{tpu_custom_call.1} parent=1 // pred_check_branch
      %99 = sbr.rel (0) target = $region45
    $region44: #{tpu_custom_call.1} parent=1 // pred_region
      %100 = dma.done [#allocation9], 1024
    $region45: #{tpu_custom_call.1} parent=1 // pred_fallthru
      _
    // Predicated region
    $region46: #{tpu_custom_call.1} parent=1 // pred_check
      _
    $region47: #{tpu_custom_call.1} parent=1 // pred_check_branch
      %102 = sbr.rel (0) target = $region49
    $region48: #{tpu_custom_call.1} parent=1 // pred_region
      %103 = dma.done [#allocation12], 1024
    $region49: #{tpu_custom_call.1} parent=1 // pred_fallthru
      _
    %v105 = vld [vmem:[#allocation2] sm:$0xff]
    %v106 = vpack.c.bf16 %v105, %v105
    %v107 = vld [vmem:[#allocation5] sm:$0xf]
    %v108 = vld [vmem:[#allocation5 + $0x4] sm:$0xf]
    %v109 = vld [vmem:[#allocation5 + $0x8] sm:$0xf]
    %v110 = vld [vmem:[#allocation5 + $0xc] sm:$0xf]
    %v115 = vunpack.c.l.b16 %v107
    %v116 = vunpack.c.l.b16 %v108
    %v117 = vunpack.c.l.b16 %v109
    %v118 = vunpack.c.l.b16 %v110
    %v119 = vpack.c.b16 %v116, %v115
    %v120 = vpack.c.b16 %v118, %v117
    %vm123 = vcmask 261120
    %v125 = vsel %vm123, %v106, 0
    %127 = vmatprep.subr.bf16.mxu0 0
    %128 = vmatpush1.bf16.msra.mxu0 0
    %129 = vmatprep.subr.bf16.mxu0 0
    %130 = vmatpush1.bf16.msra.mxu0 0
    %131 = vmatprep.subr.bf16.mxu0 0
    %132 = vmatpush1.bf16.msra.mxu0 0
    %133 = vmatprep.subr.bf16.mxu0 0
    %134 = vmatpush1.bf16.msra.mxu0 0
    %135 = vmatprep.subr.bf16.mxu0 0
    %136 = vmatpush1.bf16.msra.mxu0 0
    %137 = vmatprep.subr.bf16.mxu0 0
    %138 = vmatpush1.bf16.msra.mxu0 0
    %139 = vmatprep.subr.bf16.mxu0 0
    %140 = vmatpush1.bf16.msra.mxu0 %v120
    %141 = vmatprep.subr.bf16.mxu0 0
    %142 = vmatpush1.bf16.msra.mxu0 %v119
    %143 = vmatprep.subr.bf16.mxu0 0
    %144 = vmatpush2.bf16.msra.mxu0 0
    %145 = vmatprep.subr.bf16.mxu0 0
    %146 = vmatpush2.bf16.msra.mxu0 0
    %147 = vmatprep.subr.bf16.mxu0 0
    %148 = vmatpush2.bf16.msra.mxu0 0
    %149 = vmatprep.subr.bf16.mxu0 0
    %150 = vmatpush2.bf16.msra.mxu0 0
    %151 = vmatprep.subr.bf16.mxu0 0
    %152 = vmatpush2.bf16.msra.mxu0 0
    %153 = vmatprep.subr.bf16.mxu0 0
    %154 = vmatpush2.bf16.msra.mxu0 0
    %155 = vmatprep.subr.bf16.mxu0 0
    %156 = vmatpush2.bf16.msra.mxu0 0
    %157 = vmatprep.subr.bf16.mxu0 0
    %158 = vmatpush2.bf16.msra.mxu0 0
    %159 = vmatprep.mubr.bf16.mxu0 0
    %160 = vmatmul.mubr.bf16.gmra.mxu0 %v125
    %v161 = vpop.f32.mrf.mxu0
    %v162 = vadd.f32 0.0, %v161
    %v163 = vpop.f32.mrf.mxu0
    %v164 = vpop.f32.mrf.mxu0
    %v165 = vpop.f32.mrf.mxu0
    %166 = vdwg.mxu0
    %v167 = vmax.f32 %v162, 0.0
    %v168 = vpack.c.bf16 %v167, %v167
    %v169 = vld [vmem:[#allocation7] sm:$0xf]
    %v170 = vld [vmem:[#allocation7 + $0x4] sm:$0xf]
    %v171 = vld [vmem:[#allocation7 + $0x8] sm:$0xf]
    %v172 = vld [vmem:[#allocation7 + $0xc] sm:$0xf]
    %v177 = vunpack.c.l.b16 %v169
    %v178 = vunpack.c.l.b16 %v170
    %v179 = vunpack.c.l.b16 %v171
    %v180 = vunpack.c.l.b16 %v172
    %v181 = vpack.c.b16 %v178, %v177
    %v182 = vpack.c.b16 %v180, %v179
    %v186 = vsel %vm123, %v168, 0
    %188 = vmatprep.subr.bf16.mxu0 0
    %189 = vmatpush1.bf16.msra.mxu0 0
    %190 = vmatprep.subr.bf16.mxu0 0
    %191 = vmatpush1.bf16.msra.mxu0 0
    %192 = vmatprep.subr.bf16.mxu0 0
    %193 = vmatpush1.bf16.msra.mxu0 0
    %194 = vmatprep.subr.bf16.mxu0 0
    %195 = vmatpush1.bf16.msra.mxu0 0
    %196 = vmatprep.subr.bf16.mxu0 0
    %197 = vmatpush1.bf16.msra.mxu0 0
    %198 = vmatprep.subr.bf16.mxu0 0
    %199 = vmatpush1.bf16.msra.mxu0 0
    %200 = vmatprep.subr.bf16.mxu0 0
    %201 = vmatpush1.bf16.msra.mxu0 %v182
    %202 = vmatprep.subr.bf16.mxu0 0
    %203 = vmatpush1.bf16.msra.mxu0 %v181
    %204 = vmatprep.subr.bf16.mxu0 0
    %205 = vmatpush2.bf16.msra.mxu0 0
    %206 = vmatprep.subr.bf16.mxu0 0
    %207 = vmatpush2.bf16.msra.mxu0 0
    %208 = vmatprep.subr.bf16.mxu0 0
    %209 = vmatpush2.bf16.msra.mxu0 0
    %210 = vmatprep.subr.bf16.mxu0 0
    %211 = vmatpush2.bf16.msra.mxu0 0
    %212 = vmatprep.subr.bf16.mxu0 0
    %213 = vmatpush2.bf16.msra.mxu0 0
    %214 = vmatprep.subr.bf16.mxu0 0
    %215 = vmatpush2.bf16.msra.mxu0 0
    %216 = vmatprep.subr.bf16.mxu0 0
    %217 = vmatpush2.bf16.msra.mxu0 0
    %218 = vmatprep.subr.bf16.mxu0 0
    %219 = vmatpush2.bf16.msra.mxu0 0
    %220 = vmatprep.mubr.bf16.mxu0 0
    %221 = vmatmul.mubr.bf16.gmra.mxu0 %v186
    %v222 = vpop.f32.mrf.mxu0
    %v223 = vadd.f32 0.0, %v222
    %v224 = vpop.f32.mrf.mxu0
    %v225 = vpop.f32.mrf.mxu0
    %v226 = vpop.f32.mrf.mxu0
    %227 = vdwg.mxu0
    %v228 = vmax.f32 %v223, 0.0
    %v229 = vpack.c.bf16 %v228, %v228
    %v230 = vld [vmem:[#allocation8] sm:$0xf]
    %v231 = vld [vmem:[#allocation8 + $0x4] sm:$0xf]
    %v232 = vld [vmem:[#allocation8 + $0x8] sm:$0xf]
    %v233 = vld [vmem:[#allocation8 + $0xc] sm:$0xf]
    %v234 = vld [vmem:[#allocation8 + $0x10] sm:$0xf]
    %v235 = vld [vmem:[#allocation8 + $0x14] sm:$0xf]
    %v236 = vld [vmem:[#allocation8 + $0x18] sm:$0xf]
    %v237 = vld [vmem:[#allocation8 + $0x1c] sm:$0xf]
    %v238 = vld [vmem:[#allocation8 + $0x20] sm:$0xf]
    %v239 = vld [vmem:[#allocation8 + $0x24] sm:$0xf]
    %v240 = vld [vmem:[#allocation8 + $0x28] sm:$0xf]
    %v241 = vld [vmem:[#allocation8 + $0x2c] sm:$0xf]
    %v242 = vld [vmem:[#allocation8 + $0x30] sm:$0xf]
    %v243 = vld [vmem:[#allocation8 + $0x34] sm:$0xf]
    %v244 = vld [vmem:[#allocation8 + $0x38] sm:$0xf]
    %v245 = vld [vmem:[#allocation8 + $0x3c] sm:$0xf]
    %v262 = vunpack.c.l.b16 %v230
    %v263 = vunpack.c.l.b16 %v231
    %v264 = vunpack.c.l.b16 %v232
    %v265 = vunpack.c.l.b16 %v233
    %v266 = vunpack.c.l.b16 %v234
    %v267 = vunpack.c.l.b16 %v235
    %v268 = vunpack.c.l.b16 %v236
    %v269 = vunpack.c.l.b16 %v237
    %v270 = vunpack.c.l.b16 %v238
    %v271 = vunpack.c.l.b16 %v239
    %v272 = vunpack.c.l.b16 %v240
    %v273 = vunpack.c.l.b16 %v241
    %v274 = vunpack.c.l.b16 %v242
    %v275 = vunpack.c.l.b16 %v243
    %v276 = vunpack.c.l.b16 %v244
    %v277 = vunpack.c.l.b16 %v245
    %v278 = vpack.c.b16 %v263, %v262
    %v279 = vpack.c.b16 %v265, %v264
    %v280 = vpack.c.b16 %v267, %v266
    %v281 = vpack.c.b16 %v269, %v268
    %v282 = vpack.c.b16 %v271, %v270
    %v283 = vpack.c.b16 %v273, %v272
    %v284 = vpack.c.b16 %v275, %v274
    %v285 = vpack.c.b16 %v277, %v276
    %294 = vmatprep.subr.bf16.mxu0 0
    %295 = vmatpush1.bf16.msra.mxu0 %v285
    %296 = vmatprep.subr.bf16.mxu0 0
    %297 = vmatpush1.bf16.msra.mxu0 %v284
    %298 = vmatprep.subr.bf16.mxu0 0
    %299 = vmatpush1.bf16.msra.mxu0 %v283
    %300 = vmatprep.subr.bf16.mxu0 0
    %301 = vmatpush1.bf16.msra.mxu0 %v282
    %302 = vmatprep.subr.bf16.mxu0 0
    %303 = vmatpush1.bf16.msra.mxu0 %v281
    %304 = vmatprep.subr.bf16.mxu0 0
    %305 = vmatpush1.bf16.msra.mxu0 %v280
    %306 = vmatprep.subr.bf16.mxu0 0
    %307 = vmatpush1.bf16.msra.mxu0 %v279
    %308 = vmatprep.subr.bf16.mxu0 0
    %309 = vmatpush1.bf16.msra.mxu0 %v278
    %310 = vmatprep.subr.bf16.mxu0 0
    %311 = vmatpush2.bf16.msra.mxu0 0
    %312 = vmatprep.subr.bf16.mxu0 0
    %313 = vmatpush2.bf16.msra.mxu0 0
    %314 = vmatprep.subr.bf16.mxu0 0
    %315 = vmatpush2.bf16.msra.mxu0 0
    %316 = vmatprep.subr.bf16.mxu0 0
    %317 = vmatpush2.bf16.msra.mxu0 0
    %318 = vmatprep.subr.bf16.mxu0 0
    %319 = vmatpush2.bf16.msra.mxu0 0
    %320 = vmatprep.subr.bf16.mxu0 0
    %321 = vmatpush2.bf16.msra.mxu0 0
    %322 = vmatprep.subr.bf16.mxu0 0
    %323 = vmatpush2.bf16.msra.mxu0 0
    %324 = vmatprep.subr.bf16.mxu0 0
    %325 = vmatpush2.bf16.msra.mxu0 0
    %326 = vmatprep.mubr.bf16.mxu0 0
    %327 = vmatmul.mubr.bf16.gmra.mxu0 %v229
    %v328 = vpop.f32.mrf.mxu0
    %v329 = vadd.f32 0.0, %v328
    %v330 = vpop.f32.mrf.mxu0
    %v331 = vpop.f32.mrf.mxu0
    %v332 = vpop.f32.mrf.mxu0
    %333 = vdwg.mxu0
    %v334 = vmax.f32 %v329, 0.0
    %v335 = vpack.c.bf16 %v334, %v334
    %v336 = vld [vmem:[#allocation10] sm:$0xf]
    %v337 = vld [vmem:[#allocation10 + $0x4] sm:$0xf]
    %v338 = vld [vmem:[#allocation10 + $0x8] sm:$0xf]
    %v339 = vld [vmem:[#allocation10 + $0xc] sm:$0xf]
    %v340 = vld [vmem:[#allocation10 + $0x10] sm:$0xf]
    %v341 = vld [vmem:[#allocation10 + $0x14] sm:$0xf]
    %v342 = vld [vmem:[#allocation10 + $0x18] sm:$0xf]
    %v343 = vld [vmem:[#allocation10 + $0x1c] sm:$0xf]
    %v344 = vld [vmem:[#allocation10 + $0x20] sm:$0xf]
    %v345 = vld [vmem:[#allocation10 + $0x24] sm:$0xf]
    %v346 = vld [vmem:[#allocation10 + $0x28] sm:$0xf]
    %v347 = vld [vmem:[#allocation10 + $0x2c] sm:$0xf]
    %v348 = vld [vmem:[#allocation10 + $0x30] sm:$0xf]
    %v349 = vld [vmem:[#allocation10 + $0x34] sm:$0xf]
    %v350 = vld [vmem:[#allocation10 + $0x38] sm:$0xf]
    %v351 = vld [vmem:[#allocation10 + $0x3c] sm:$0xf]
    %v368 = vunpack.c.l.b16 %v336
    %v369 = vunpack.c.l.b16 %v337
    %v370 = vunpack.c.l.b16 %v338
    %v371 = vunpack.c.l.b16 %v339
    %v372 = vunpack.c.l.b16 %v340
    %v373 = vunpack.c.l.b16 %v341
    %v374 = vunpack.c.l.b16 %v342
    %v375 = vunpack.c.l.b16 %v343
    %v376 = vunpack.c.l.b16 %v344
    %v377 = vunpack.c.l.b16 %v345
    %v378 = vunpack.c.l.b16 %v346
    %v379 = vunpack.c.l.b16 %v347
    %v380 = vunpack.c.l.b16 %v348
    %v381 = vunpack.c.l.b16 %v349
    %v382 = vunpack.c.l.b16 %v350
    %v383 = vunpack.c.l.b16 %v351
    %v384 = vpack.c.b16 %v369, %v368
    %v385 = vpack.c.b16 %v371, %v370
    %v386 = vpack.c.b16 %v373, %v372
    %v387 = vpack.c.b16 %v375, %v374
    %v388 = vpack.c.b16 %v377, %v376
    %v389 = vpack.c.b16 %v379, %v378
    %v390 = vpack.c.b16 %v381, %v380
    %v391 = vpack.c.b16 %v383, %v382
    %400 = vmatprep.subr.bf16.mxu0 0
    %401 = vmatpush1.bf16.msra.mxu0 %v391
    %402 = vmatprep.subr.bf16.mxu0 0
    %403 = vmatpush1.bf16.msra.mxu0 %v390
    %404 = vmatprep.subr.bf16.mxu0 0
    %405 = vmatpush1.bf16.msra.mxu0 %v389
    %406 = vmatprep.subr.bf16.mxu0 0
    %407 = vmatpush1.bf16.msra.mxu0 %v388
    %408 = vmatprep.subr.bf16.mxu0 0
    %409 = vmatpush1.bf16.msra.mxu0 %v387
    %410 = vmatprep.subr.bf16.mxu0 0
    %411 = vmatpush1.bf16.msra.mxu0 %v386
    %412 = vmatprep.subr.bf16.mxu0 0
    %413 = vmatpush1.bf16.msra.mxu0 %v385
    %414 = vmatprep.subr.bf16.mxu0 0
    %415 = vmatpush1.bf16.msra.mxu0 %v384
    %416 = vmatprep.subr.bf16.mxu0 0
    %417 = vmatpush2.bf16.msra.mxu0 0
    %418 = vmatprep.subr.bf16.mxu0 0
    %419 = vmatpush2.bf16.msra.mxu0 0
    %420 = vmatprep.subr.bf16.mxu0 0
    %421 = vmatpush2.bf16.msra.mxu0 0
    %422 = vmatprep.subr.bf16.mxu0 0
    %423 = vmatpush2.bf16.msra.mxu0 0
    %424 = vmatprep.subr.bf16.mxu0 0
    %425 = vmatpush2.bf16.msra.mxu0 0
    %426 = vmatprep.subr.bf16.mxu0 0
    %427 = vmatpush2.bf16.msra.mxu0 0
    %428 = vmatprep.subr.bf16.mxu0 0
    %429 = vmatpush2.bf16.msra.mxu0 0
    %430 = vmatprep.subr.bf16.mxu0 0
    %431 = vmatpush2.bf16.msra.mxu0 0
    %432 = vmatprep.mubr.bf16.mxu0 0
    %433 = vmatmul.mubr.bf16.gmra.mxu0 %v335
    %v434 = vpop.f32.mrf.mxu0
    %v435 = vadd.f32 0.0, %v434
    %v436 = vpop.f32.mrf.mxu0
    %v437 = vpop.f32.mrf.mxu0
    %v438 = vpop.f32.mrf.mxu0
    %439 = vdwg.mxu0
    %v440 = vmax.f32 %v435, 0.0
    %v441 = vpack.c.bf16 %v440, %v440
    %v442 = vld [vmem:[#allocation11] sm:$0xf]
    %v443 = vld [vmem:[#allocation11 + $0x4] sm:$0xf]
    %v444 = vld [vmem:[#allocation11 + $0x8] sm:$0xf]
    %v445 = vld [vmem:[#allocation11 + $0xc] sm:$0xf]
    %v446 = vld [vmem:[#allocation11 + $0x10] sm:$0xf]
    %v447 = vld [vmem:[#allocation11 + $0x14] sm:$0xf]
    %v448 = vld [vmem:[#allocation11 + $0x18] sm:$0xf]
    %v449 = vld [vmem:[#allocation11 + $0x1c] sm:$0xf]
    %v450 = vld [vmem:[#allocation11 + $0x20] sm:$0xf]
    %v451 = vld [vmem:[#allocation11 + $0x24] sm:$0xf]
    %v452 = vld [vmem:[#allocation11 + $0x28] sm:$0xf]
    %v453 = vld [vmem:[#allocation11 + $0x2c] sm:$0xf]
    %v454 = vld [vmem:[#allocation11 + $0x30] sm:$0xf]
    %v455 = vld [vmem:[#allocation11 + $0x34] sm:$0xf]
    %v456 = vld [vmem:[#allocation11 + $0x38] sm:$0xf]
    %v457 = vld [vmem:[#allocation11 + $0x3c] sm:$0xf]
    %v474 = vunpack.c.l.b16 %v442
    %v475 = vunpack.c.l.b16 %v443
    %v476 = vunpack.c.l.b16 %v444
    %v477 = vunpack.c.l.b16 %v445
    %v478 = vunpack.c.l.b16 %v446
    %v479 = vunpack.c.l.b16 %v447
    %v480 = vunpack.c.l.b16 %v448
    %v481 = vunpack.c.l.b16 %v449
    %v482 = vunpack.c.l.b16 %v450
    %v483 = vunpack.c.l.b16 %v451
    %v484 = vunpack.c.l.b16 %v452
    %v485 = vunpack.c.l.b16 %v453
    %v486 = vunpack.c.l.b16 %v454
    %v487 = vunpack.c.l.b16 %v455
    %v488 = vunpack.c.l.b16 %v456
    %v489 = vunpack.c.l.b16 %v457
    %v490 = vpack.c.b16 %v475, %v474
    %v491 = vpack.c.b16 %v477, %v476
    %v492 = vpack.c.b16 %v479, %v478
    %v493 = vpack.c.b16 %v481, %v480
    %v494 = vpack.c.b16 %v483, %v482
    %v495 = vpack.c.b16 %v485, %v484
    %v496 = vpack.c.b16 %v487, %v486
    %v497 = vpack.c.b16 %v489, %v488
    %506 = vmatprep.subr.bf16.mxu0 0
    %507 = vmatpush1.bf16.msra.mxu0 %v497
    %508 = vmatprep.subr.bf16.mxu0 0
    %509 = vmatpush1.bf16.msra.mxu0 %v496
    %510 = vmatprep.subr.bf16.mxu0 0
    %511 = vmatpush1.bf16.msra.mxu0 %v495
    %512 = vmatprep.subr.bf16.mxu0 0
    %513 = vmatpush1.bf16.msra.mxu0 %v494
    %514 = vmatprep.subr.bf16.mxu0 0
    %515 = vmatpush1.bf16.msra.mxu0 %v493
    %516 = vmatprep.subr.bf16.mxu0 0
    %517 = vmatpush1.bf16.msra.mxu0 %v492
    %518 = vmatprep.subr.bf16.mxu0 0
    %519 = vmatpush1.bf16.msra.mxu0 %v491
    %520 = vmatprep.subr.bf16.mxu0 0
    %521 = vmatpush1.bf16.msra.mxu0 %v490
    %522 = vmatprep.subr.bf16.mxu0 0
    %523 = vmatpush2.bf16.msra.mxu0 0
    %524 = vmatprep.subr.bf16.mxu0 0
    %525 = vmatpush2.bf16.msra.mxu0 0
    %526 = vmatprep.subr.bf16.mxu0 0
    %527 = vmatpush2.bf16.msra.mxu0 0
    %528 = vmatprep.subr.bf16.mxu0 0
    %529 = vmatpush2.bf16.msra.mxu0 0
    %530 = vmatprep.subr.bf16.mxu0 0
    %531 = vmatpush2.bf16.msra.mxu0 0
    %532 = vmatprep.subr.bf16.mxu0 0
    %533 = vmatpush2.bf16.msra.mxu0 0
    %534 = vmatprep.subr.bf16.mxu0 0
    %535 = vmatpush2.bf16.msra.mxu0 0
    %536 = vmatprep.subr.bf16.mxu0 0
    %537 = vmatpush2.bf16.msra.mxu0 0
    %538 = vmatprep.mubr.bf16.mxu0 0
    %539 = vmatmul.mubr.bf16.gmra.mxu0 %v441
    %v540 = vpop.f32.mrf.mxu0
    %v541 = vadd.f32 0.0, %v540
    %v542 = vpop.f32.mrf.mxu0
    %v543 = vpop.f32.mrf.mxu0
    %v544 = vpop.f32.mrf.mxu0
    %545 = vdwg.mxu0
    %v546 = vsub.f32 0.0, %v541
    %v547 = vmul.f32 %v546, 1.442695
    %v548 = vpow.pop %v547
    %v549 = vadd.f32 %v548, 1.0
    %v550 = vrcp.pop %v549
    %551 = vst [vmem:[#allocation13] sm:$0xff] %v550
    // Predicated region
    $region50: #{tpu_custom_call.1} parent=1 // pred_check
      _
    $region51: #{tpu_custom_call.1} parent=1 // pred_check_branch
      %553 = sbr.rel (0) target = $region53
    $region52: #{tpu_custom_call.1} parent=1 // pred_region
      %s555 = ssub.s32 128, 128
      %556 = vsyncadd [#allocation4], %s555
      %s558 = sshll.u32 [#allocation13], 4
      %s559 = int_to_ptr.vmem [resolvable:$true] %s558
      %561 = dma.vmem_to_hbm [thread:$0]  %s559, 128, %s6, [#allocation4]
    $region53: #{tpu_custom_call.1} parent=1 // pred_fallthru
      _
    // Predicated region
    $region54: #{tpu_custom_call.1} parent=1 // pred_check
      _
    $region55: #{tpu_custom_call.1} parent=1 // pred_check_branch
      %563 = sbr.rel (0) target = $region57
    $region56: #{tpu_custom_call.1} parent=1 // pred_region
      %564 = dma.done [#allocation4], 128
    $region57: #{tpu_custom_call.1} parent=1 // pred_fallthru
      _
    %565 = vsyncpa [#allocation3], 1
    %566 = vsyncpa [#allocation6], 1
    %567 = vsyncpa [#allocation9], 1
    %568 = vsyncpa [#allocation12], 1
    %569 = vsyncpa [#allocation4], 1

</llo_original>
